<compile_context>
chip_gen: v7x
topology: tpu7x:2x2x1
jax: 0.10.0
libtpu: 0.0.40
codegen_flags: <defaults>
</compile_context>

<pallas_src>
import jax
import jax.numpy as jnp
from jax.experimental import pallas as pl
from jax.experimental.pallas import tpu as pltpu

IN_FEATURES = 131072
NUM_CLASSES = 2
LANES = 128


def linear_kernel(x_ref, w_ref, b_ref, o_ref):
    """One K-chunk of y = x @ W.T + b, accumulated into the resident o_ref.

    x_ref: (B, rows, 128) f32  dense slabs, no sublane padding
    w_ref: (N, rows, 128) f32  native nn.Linear weight, K split into slabs
    b_ref: (1, N)         f32  bias, added once on the last step (fused)
    o_ref: (B, N)         f32  output block, resident across the k axis
    """
    k = pl.program_id(0)

    @pl.when(k == 0)
    def _():
        o_ref[...] = jnp.zeros_like(o_ref)

    x = x_ref[...]                                   # (B, rows, 128)
    num_classes = w_ref.shape[0]

    # Per class: dense VPU multiply of the whole slab, then sublane reduce
    # followed by a cross-lane reduce (XLU). The MXU is deliberately unused.
    cols = []
    for n in range(num_classes):
        prod = x * w_ref[n]                          # (B, rows, 128)  VPU
        col = jnp.sum(jnp.sum(prod, axis=1), axis=-1, keepdims=True)  # (B, 1)
        cols.append(col)
    o_ref[...] += jnp.concatenate(cols, axis=-1)     # (B, N)

    @pl.when(k == pl.num_programs(0) - 1)
    def _():
        o_ref[...] += b_ref[...]                     # fused bias add


def logistic_regression_forward(x, weight, bias, *, tk=65536):
    """x: (B, K) f32, weight: (N, K) f32 (native nn.Linear layout), bias: (N,)."""
    B, K = x.shape
    N, Kw = weight.shape
    assert K == Kw, "weight feature dim must match x"
    assert K % LANES == 0, "K must be a multiple of 128"
    tk = min(tk, K)
    assert tk % LANES == 0 and K % tk == 0, "K must divide evenly into tk chunks"

    rows_total = K // LANES
    rows_step = tk // LANES
    steps = K // tk

    # Layout plumbing only (trivial dimension splits, no data movement).
    x3 = x.reshape(B, rows_total, LANES)
    w3 = weight.reshape(N, rows_total, LANES)
    b2 = bias.reshape(1, N)

    return pl.pallas_call(
        linear_kernel,
        out_shape=jax.ShapeDtypeStruct((B, N), jnp.float32),
        grid_spec=pltpu.PrefetchScalarGridSpec(
            num_scalar_prefetch=0,
            grid=(steps,),
            in_specs=[
                pl.BlockSpec((B, rows_step, LANES), lambda k: (0, k, 0)),
                pl.BlockSpec((N, rows_step, LANES), lambda k: (0, k, 0)),
                pl.BlockSpec((1, N), lambda k: (0, 0)),
            ],
            out_specs=pl.BlockSpec((B, N), lambda k: (0, 0)),
        ),
        compiler_params=pltpu.CompilerParams(
            dimension_semantics=("arbitrary",),
            vmem_limit_bytes=32 * 1024 * 1024,
        ),
    )(x3, w3, b2)


if __name__ == "__main__":
    key = jax.random.PRNGKey(0)
    k_x, k_w, k_b = jax.random.split(key, 3)

    B = 2  # small batch; the feature dim is fixed by the module at 131072

    # Deterministic parameter init mimicking nn.Linear defaults:
    # weight, bias ~ U(-1/sqrt(in_features), 1/sqrt(in_features))
    bound = 1.0 / (IN_FEATURES ** 0.5)
    weight = jax.random.uniform(
        k_w, (NUM_CLASSES, IN_FEATURES), jnp.float32, -bound, bound
    )  # native nn.Linear layout (out_features, in_features) — used as-is
    bias = jax.random.uniform(k_b, (NUM_CLASSES,), jnp.float32, -bound, bound)

    x = jax.random.normal(k_x, (B, IN_FEATURES), jnp.float32)

    out = logistic_regression_forward(x, weight, bias)
    out = jax.block_until_ready(out)

    # Reference check (f32 accumulation, same math as nn.Linear forward).
    ref = (
        jnp.dot(x, weight.T, precision=jax.lax.Precision.HIGHEST)
        + bias[None, :]
    )
    assert out.shape == (B, NUM_CLASSES)
    assert jnp.allclose(out, ref, atol=1e-3, rtol=1e-3)

    print("KERNEL_OK")
</pallas_src>

<mosaic_0001>
module attributes {stable_mosaic.version = 11 : i64} {
  func.func @linear_kernel(%arg0: i32, %arg1: memref<2x512x128xf32, #tpu.memory_space<vmem>>, %arg2: memref<2x512x128xf32, #tpu.memory_space<vmem>>, %arg3: memref<1x2xf32, #tpu.memory_space<vmem>>, %arg4: memref<2x2xf32, #tpu.memory_space<vmem>>) attributes {dimension_semantics = [#tpu.dimension_semantics<arbitrary>], iteration_bounds = array<i64: 2>, scalar_prefetch = 0 : i64, scratch_operands = 0 : i64, tpu.core_type = #tpu.core_type<tc>, window_params = [{transform_indices = @transform_0, window_bounds = array<i64: 2, 512, 128>}, {transform_indices = @transform_1, window_bounds = array<i64: 2, 512, 128>}, {pipeline_mode = #tpu.pipeline_mode<synchronous>, transform_indices = @transform_2, window_bounds = array<i64: 1, 2>}, {pipeline_mode = #tpu.pipeline_mode<synchronous>, transform_indices = @transform_3, window_bounds = array<i64: 2, 2>}]} {
    %c0_i32 = arith.constant 0 : i32
    %0 = arith.cmpi eq, %arg0, %c0_i32 : i32
    %1 = arith.extui %0 : i1 to i32
    %c0_i32_0 = arith.constant 0 : i32
    %2 = arith.cmpi ne, %1, %c0_i32_0 : i32
    scf.if %2 {
      %cst_16 = arith.constant 0.000000e+00 : f32
      %27 = vector.broadcast %cst_16 : f32 to vector<2x2xf32>
      %c0_17 = arith.constant 0 : index
      %c0_18 = arith.constant 0 : index
      %28 = vector.load %arg4[%c0_17, %c0_18] : memref<2x2xf32, #tpu.memory_space<vmem>>, vector<2x2xf32>
      tpu.vector_store %arg4[%c0_17, %c0_18], %27 {strides = array<i32>} : memref<2x2xf32, #tpu.memory_space<vmem>>, vector<2x2xf32>,
    } else {
    }
    %c0 = arith.constant 0 : index
    %c0_1 = arith.constant 0 : index
    %c0_2 = arith.constant 0 : index
    %3 = vector.load %arg1[%c0, %c0_1, %c0_2] : memref<2x512x128xf32, #tpu.memory_space<vmem>>, vector<2x512x128xf32>
    %c0_3 = arith.constant 0 : index
    %c0_4 = arith.constant 0 : index
    %c0_5 = arith.constant 0 : index
    %4 = vector.load %arg2[%c0_3, %c0_4, %c0_5] : memref<2x512x128xf32, #tpu.memory_space<vmem>>, vector<1x512x128xf32>
    %5 = vector.shape_cast %4 : vector<1x512x128xf32> to vector<512x128xf32>
    %6 = vector.shape_cast %5 : vector<512x128xf32> to vector<1x512x128xf32>
    %7 = vector.broadcast %6 : vector<1x512x128xf32> to vector<2x512x128xf32>
    %8 = arith.mulf %3, %7 : vector<2x512x128xf32>
    %cst = arith.constant dense<0.000000e+00> : vector<2x128xf32>
    %9 = vector.multi_reduction <add>, %8, %cst [1] : vector<2x512x128xf32> to vector<2x128xf32>
    %cst_6 = arith.constant dense<0.000000e+00> : vector<2xf32>
    %10 = vector.multi_reduction <add>, %9, %cst_6 [1] : vector<2x128xf32> to vector<2xf32>
    %11 = vector.shape_cast %10 : vector<2xf32> to vector<2x1xf32>
    %c1 = arith.constant 1 : index
    %c0_7 = arith.constant 0 : index
    %c0_8 = arith.constant 0 : index
    %12 = vector.load %arg2[%c1, %c0_7, %c0_8] : memref<2x512x128xf32, #tpu.memory_space<vmem>>, vector<1x512x128xf32>
    %13 = vector.shape_cast %12 : vector<1x512x128xf32> to vector<512x128xf32>
    %14 = vector.shape_cast %13 : vector<512x128xf32> to vector<1x512x128xf32>
    %15 = vector.broadcast %14 : vector<1x512x128xf32> to vector<2x512x128xf32>
    %16 = arith.mulf %3, %15 : vector<2x512x128xf32>
    %cst_9 = arith.constant dense<0.000000e+00> : vector<2x128xf32>
    %17 = vector.multi_reduction <add>, %16, %cst_9 [1] : vector<2x512x128xf32> to vector<2x128xf32>
    %cst_10 = arith.constant dense<0.000000e+00> : vector<2xf32>
    %18 = vector.multi_reduction <add>, %17, %cst_10 [1] : vector<2x128xf32> to vector<2xf32>
    %19 = vector.shape_cast %18 : vector<2xf32> to vector<2x1xf32>
    %c0_11 = arith.constant 0 : index
    %c0_12 = arith.constant 0 : index
    %20 = vector.load %arg4[%c0_11, %c0_12] : memref<2x2xf32, #tpu.memory_space<vmem>>, vector<2x2xf32>
    %21 = tpu.concatenate %11, %19 in 1 : vector<2x1xf32>, vector<2x1xf32> -> vector<2x2xf32>
    %22 = arith.addf %20, %21 : vector<2x2xf32>
    %c0_13 = arith.constant 0 : index
    %c0_14 = arith.constant 0 : index
    %23 = vector.load %arg4[%c0_13, %c0_14] : memref<2x2xf32, #tpu.memory_space<vmem>>, vector<2x2xf32>
    tpu.vector_store %arg4[%c0_13, %c0_14], %22 {strides = array<i32>} : memref<2x2xf32, #tpu.memory_space<vmem>>, vector<2x2xf32>,
    %c1_i32 = arith.constant 1 : i32
    %24 = arith.cmpi eq, %arg0, %c1_i32 : i32
    %25 = arith.extui %24 : i1 to i32
    %c0_i32_15 = arith.constant 0 : i32
    %26 = arith.cmpi ne, %25, %c0_i32_15 : i32
    scf.if %26 {
      %c0_16 = arith.constant 0 : index
      %c0_17 = arith.constant 0 : index
      %27 = vector.load %arg4[%c0_16, %c0_17] : memref<2x2xf32, #tpu.memory_space<vmem>>, vector<2x2xf32>
      %c0_18 = arith.constant 0 : index
      %c0_19 = arith.constant 0 : index
      %28 = vector.load %arg3[%c0_18, %c0_19] : memref<1x2xf32, #tpu.memory_space<vmem>>, vector<1x2xf32>
      %29 = vector.broadcast %28 : vector<1x2xf32> to vector<2x2xf32>
      %30 = arith.addf %27, %29 : vector<2x2xf32>
      %c0_20 = arith.constant 0 : index
      %c0_21 = arith.constant 0 : index
      %31 = vector.load %arg4[%c0_20, %c0_21] : memref<2x2xf32, #tpu.memory_space<vmem>>, vector<2x2xf32>
      tpu.vector_store %arg4[%c0_20, %c0_21], %30 {strides = array<i32>} : memref<2x2xf32, #tpu.memory_space<vmem>>, vector<2x2xf32>,
    } else {
    }
    return
  }
  func.func @transform_0(%arg0: i32) -> (i32, i32, i32) {
    %c0_i32 = arith.constant 0 : i32
    %c0_i32_0 = arith.constant 0 : i32
    %c0_i32_1 = arith.constant 0 : i32
    return %c0_i32, %arg0, %c0_i32_0 : i32, i32, i32
  }
  func.func @transform_1(%arg0: i32) -> (i32, i32, i32) {
    %c0_i32 = arith.constant 0 : i32
    %c0_i32_0 = arith.constant 0 : i32
    %c0_i32_1 = arith.constant 0 : i32
    return %c0_i32, %arg0, %c0_i32_0 : i32, i32, i32
  }
  func.func @transform_2(%arg0: i32) -> (i32, i32) {
    %c0_i32 = arith.constant 0 : i32
    %c0_i32_0 = arith.constant 0 : i32
    %c0_i32_1 = arith.constant 0 : i32
    return %c0_i32, %c0_i32_0 : i32, i32
  }
  func.func @transform_3(%arg0: i32) -> (i32, i32) {
    %c0_i32 = arith.constant 0 : i32
    %c0_i32_0 = arith.constant 0 : i32
    %c0_i32_1 = arith.constant 0 : i32
    return %c0_i32, %c0_i32_0 : i32, i32
  }
}

</mosaic_0001>

<llo_original>
// kernel: tpu_custom_call.1
$region0: #{tpu_custom_call.1}
  #allocation0 [shape = 'u32[]', space=smem, size = 0x4, offset = 0x4, fixed_abs, tag = 'smem constant byte address 0x4 - core index']
  #allocation1 [shape = 'u32[144,128]{1,0:T(1,128)}', space=vmem, size = 0x12000, scoped, tag = 'internal scratch']
  #allocation8 [shape = 's32[]', space=sflag, size = 0x4, offset = 0, fixed_abs, tag = 'sflag constant byte address 0x0 - dummy sync flag']
  #allocation10 [shape = 's32[]', space=sflag, size = 0x4, offset = 0, fixed_abs, tag = 'sflag constant byte address 0x0 - dummy sync flag']
  %s0 = inlined_call_operand.hbm [shape: f32[2,1024,128], index: 0, kind: input, shape index: {}]
  %s1 = inlined_call_operand.hbm [shape: f32[2,1024,128], index: 1, kind: input, shape index: {}]
  %s2 = inlined_call_operand.vmem [shape: f32[1,2], index: 2, kind: input, shape index: {}]
  %s3 = inlined_call_operand.hbm [shape: f32[2,2], index: 3, kind: output, shape index: {}]
  %s4 = sld [smem:[#allocation0]]
  $region61: #{tpu_custom_call.1} parent=0
    _
  %s6 = ssub.s32 1, %s4
  %s7 = scalar_select 0, %s6, %s4
  $region1: #{tpu_custom_call.1} parent=0
    #allocation2 [shape = 'u8[1048576]{0}', space=vmem, size = 0x100000, scoped, tag = 'input window, operand 0']
    #allocation3 [shape = 's32[2]{0}', space=sflag, size = 0x8, scoped, tag = 'scoped memory for tpu_custom_call.1']
    #allocation4 [shape = 's32[2]{0}', space=sflag, size = 0x8, scoped, tag = 'scoped memory for tpu_custom_call.1']
    #allocation5 [shape = 'u8[1048576]{0}', space=vmem, size = 0x100000, scoped, tag = 'input window, operand 1']
    #allocation6 [shape = 's32[2]{0}', space=sflag, size = 0x8, scoped, tag = 'scoped memory for tpu_custom_call.1']
    #allocation7 [shape = 'u8[1024]{0}', space=vmem, size = 0x400, scoped, tag = 'output window, operand 0, single buffered']
    %8 = vsyncpa [#allocation3], 0
    %s9 = scalar_lea.sflag [#allocation3], 1
    %10 = vsyncpa %s9, 0
    %11 = vsyncpa [#allocation6], 0
    %s12 = scalar_lea.sflag [#allocation6], 1
    %13 = vsyncpa %s12, 0
    %14 = vsyncpa [#allocation4], 0
    loop: start=0, step=1, limit=4
    $region2: #{tpu_custom_call.1} parent=1 // loop_pre_header
      _
    $region3: #{tpu_custom_call.1} parent=1 // loop_header
      %s16 = sphi 0, %s20
      %p17 = scmp.ge.s32.totalorder %s16, 4
      %s26 = sphi 0, %s28
      %s29 = sphi 0, %s26
      %s30 = sphi 0, %s29
      %s46 = sphi 0, %s30
      %s52 = sphi 0, %s54
      %s55 = sphi 0, %s52
      %s56 = sphi 0, %s55
      %s72 = sphi 0, %s56
      %s76 = sphi 0, %s76
      %s78 = sphi 0, %s76
      %s79 = sphi 0, %s78
      %s93 = sphi 0, %s79
      %s97 = sphi 0, %s97
      %s99 = sphi 0, %s97
      %s100 = sphi 0, %s99
      %s114 = sphi 0, %s100
    $region4: #{tpu_custom_call.1} parent=1 // loop_header_branch
      %19 = sbr.rel (%p17) target = $region8
    $region5: #{tpu_custom_call.1} parent=1 // loop_body
      %s21 = ssub.s32 %s16, 1
      %s22 = ssub.s32 %s16, 2
      %s23 = sadd.s32 %s16, 1
      %s24 = ssub.s32 %s16, %s23
      %p25 = scmp.eq.s32.totalorder %s24, 0
      %s27 = sadd.s32 %s26, 1
      %s28 = scalar_select %p25, %s26, %s27
      %p31 = pneg %p25
      %p32 = scmp.eq.s32.totalorder %s16, 1
      %p33 = por %p31, %p32
      %p34 = scmp.ne.s32.totalorder %s26, %s29
      %p35 = scmp.eq.s32.totalorder %s16, 0
      %p36 = por %p34, %p35
      %p37 = scmp.ne.s32.totalorder %s26, %s29
      %p38 = scmp.eq.s32.totalorder %s21, 1
      %p39 = por %p37, %p38
      %p40 = scmp.ne.s32.totalorder %s29, %s30
      %p41 = scmp.eq.s32.totalorder %s21, 0
      %p42 = por %p40, %p41
      %p43 = scmp.ne.s32.totalorder %s29, %s30
      %p44 = scmp.eq.s32.totalorder %s22, 1
      %p45 = por %p43, %p44
      %p47 = scmp.ne.s32.totalorder %s30, %s46
      %p48 = scmp.eq.s32.totalorder %s22, 0
      %p49 = por %p47, %p48
      %s50 = ssub.s32 %s16, %s23
      %p51 = scmp.eq.s32.totalorder %s50, 0
      %s53 = sadd.s32 %s52, 1
      %s54 = scalar_select %p51, %s52, %s53
      %p57 = pneg %p51
      %p58 = scmp.eq.s32.totalorder %s16, 1
      %p59 = por %p57, %p58
      %p60 = scmp.ne.s32.totalorder %s52, %s55
      %p61 = scmp.eq.s32.totalorder %s16, 0
      %p62 = por %p60, %p61
      %p63 = scmp.ne.s32.totalorder %s52, %s55
      %p64 = scmp.eq.s32.totalorder %s21, 1
      %p65 = por %p63, %p64
      %p66 = scmp.ne.s32.totalorder %s55, %s56
      %p67 = scmp.eq.s32.totalorder %s21, 0
      %p68 = por %p66, %p67
      %p69 = scmp.ne.s32.totalorder %s55, %s56
      %p70 = scmp.eq.s32.totalorder %s22, 1
      %p71 = por %p69, %p70
      %p73 = scmp.ne.s32.totalorder %s56, %s72
      %p74 = scmp.eq.s32.totalorder %s22, 0
      %p75 = por %p73, %p74
      %s77 = sadd.s32 %s76, 1
      %p80 = scmp.eq.s32.totalorder %s16, 1
      %p81 = scmp.ne.s32.totalorder %s76, %s78
      %p82 = scmp.eq.s32.totalorder %s16, 0
      %p83 = por %p81, %p82
      %p84 = scmp.ne.s32.totalorder %s76, %s78
      %p85 = scmp.eq.s32.totalorder %s21, 1
      %p86 = por %p84, %p85
      %p87 = scmp.ne.s32.totalorder %s78, %s79
      %p88 = scmp.eq.s32.totalorder %s21, 0
      %p89 = por %p87, %p88
      %p90 = scmp.ne.s32.totalorder %s78, %s79
      %p91 = scmp.eq.s32.totalorder %s22, 1
      %p92 = por %p90, %p91
      %p94 = scmp.ne.s32.totalorder %s79, %s93
      %p95 = scmp.eq.s32.totalorder %s22, 0
      %p96 = por %p94, %p95
      %s98 = sadd.s32 %s97, 1
      %p101 = scmp.eq.s32.totalorder %s16, 1
      %p102 = scmp.ne.s32.totalorder %s97, %s99
      %p103 = scmp.eq.s32.totalorder %s16, 0
      %p104 = por %p102, %p103
      %p105 = scmp.ne.s32.totalorder %s97, %s99
      %p106 = scmp.eq.s32.totalorder %s21, 1
      %p107 = por %p105, %p106
      %p108 = scmp.ne.s32.totalorder %s99, %s100
      %p109 = scmp.eq.s32.totalorder %s21, 0
      %p110 = por %p108, %p109
      %p111 = scmp.ne.s32.totalorder %s99, %s100
      %p112 = scmp.eq.s32.totalorder %s22, 1
      %p113 = por %p111, %p112
      %p115 = scmp.ne.s32.totalorder %s100, %s114
      %p116 = scmp.eq.s32.totalorder %s22, 0
      %p117 = por %p115, %p116
      %p118 = scmp.le.s32.totalorder 1, %s16
      %p119 = scmp.lt.s32.totalorder %s16, 3
      %p120 = pnand %p118, %p119
      %p121 = pneg %p120
      // Predicated region
      $region9: #{tpu_custom_call.1} parent=5 // pred_check
        _
      $region10: #{tpu_custom_call.1} parent=5 // pred_check_branch
        %123 = sbr.rel (%p120) target = $region12
      $region11: #{tpu_custom_call.1} parent=5 // pred_region
        %s124 = ssub.s32 %s16, 1
        // Predicated region
        $region13: #{tpu_custom_call.1} parent=11 // pred_check
          %p125 = pneg %p89
        $region14: #{tpu_custom_call.1} parent=11 // pred_check_branch
          %127 = sbr.rel (%p125) target = $region16
        $region15: #{tpu_custom_call.1} parent=11 // pred_region
          _
        $region16: #{tpu_custom_call.1} parent=11 // pred_fallthru
          _
      $region12: #{tpu_custom_call.1} parent=5 // pred_fallthru
        _
      %p128 = scmp.lt.s32.totalorder %s16, 2
      // Predicated region
      $region17: #{tpu_custom_call.1} parent=5 // pred_check
        %p129 = pneg %p128
      $region18: #{tpu_custom_call.1} parent=5 // pred_check_branch
        %131 = sbr.rel (%p129) target = $region20
      $region19: #{tpu_custom_call.1} parent=5 // pred_region
        // Predicated region
        $region21: #{tpu_custom_call.1} parent=19 // pred_check
          %p132 = pneg %p36
        $region22: #{tpu_custom_call.1} parent=19 // pred_check_branch
          %134 = sbr.rel (%p132) target = $region24
        $region23: #{tpu_custom_call.1} parent=19 // pred_region
          #allocation9 [shape = 'u32[6]{0}', space=smem, size = 0x18, scoped, tag = 'DMA stride descriptor']
          %s135 = sand.u32 %s26, 1
          %s136 = scalar_lea.sflag [#allocation3], %s135
          %s137 = sand.u32 %s26, 1
          %s138 = smul.addr %s137, 1024
          %s139 = scalar_lea.vmem [#allocation2], %s138
          %s140 = smul.u32 64, %s16
          %s142 = ssub.s32 16384, 16384
          %143 = vsyncadd %s136, %s142
          %s144 = smul.addr %s140, 128
          %s145 = scalar_lea.hbm %s0, %s144
          %s147 = sshll.u32 1, 14
          %s148 = sxor.u32 4294967295, %s147
          %s150 = sld [smem:[#allocation0]]
          %s151 = sadd.s32 2, %s150
          %s153 = sshll.u32 7, 26
          %s154 = sxor.u32 4294967295, %s153
          %s155 = sand.u32 0, %s154
          %s156 = sshll.u32 %s151, 26
          %s157 = sor.u32 %s155, %s156
          %s158 = sshll.u32 %s139, 4
          %s159 = int_to_ptr.vmem [resolvable:$true] %s158
          %165 = sst [smem:[#allocation9]] 16384
          %s166 = scalar_lea.smem [#allocation9], 1
          %167 = sst [smem:[%s166]] 8192
          %s168 = scalar_lea.smem [#allocation9], 2
          %169 = sst [smem:[%s168]] 64
          %s170 = scalar_lea.smem [#allocation9], 3
          %171 = sst [smem:[%s170]] 128
          %s172 = scalar_lea.smem [#allocation9], 4
          %173 = sst [smem:[%s172]] 128
          %s174 = scalar_lea.smem [#allocation9], 5
          %175 = sst [smem:[%s174]] 8
          %177 = dma.general %s145, 16384, %s159, %s136, [#allocation8], [#allocation9], %s157, 0
        $region24: #{tpu_custom_call.1} parent=19 // pred_fallthru
          _
        // Predicated region
        $region25: #{tpu_custom_call.1} parent=19 // pred_check
          %p178 = pneg %p62
        $region26: #{tpu_custom_call.1} parent=19 // pred_check_branch
          %180 = sbr.rel (%p178) target = $region28
        $region27: #{tpu_custom_call.1} parent=19 // pred_region
          #allocation11 [shape = 'u32[6]{0}', space=smem, size = 0x18, scoped, tag = 'DMA stride descriptor']
          %s181 = sand.u32 %s52, 1
          %s182 = scalar_lea.sflag [#allocation6], %s181
          %s183 = sand.u32 %s52, 1
          %s184 = smul.addr %s183, 1024
          %s185 = scalar_lea.vmem [#allocation5], %s184
          %s186 = smul.u32 64, %s16
          %s188 = ssub.s32 16384, 16384
          %189 = vsyncadd %s182, %s188
          %s190 = smul.addr %s186, 128
          %s191 = scalar_lea.hbm %s1, %s190
          %s193 = sshll.u32 1, 14
          %s194 = sxor.u32 4294967295, %s193
          %s196 = sld [smem:[#allocation0]]
          %s197 = sadd.s32 2, %s196
          %s199 = sshll.u32 7, 26
          %s200 = sxor.u32 4294967295, %s199
          %s201 = sand.u32 0, %s200
          %s202 = sshll.u32 %s197, 26
          %s203 = sor.u32 %s201, %s202
          %s204 = sshll.u32 %s185, 4
          %s205 = int_to_ptr.vmem [resolvable:$true] %s204
          %211 = sst [smem:[#allocation11]] 16384
          %s212 = scalar_lea.smem [#allocation11], 1
          %213 = sst [smem:[%s212]] 8192
          %s214 = scalar_lea.smem [#allocation11], 2
          %215 = sst [smem:[%s214]] 64
          %s216 = scalar_lea.smem [#allocation11], 3
          %217 = sst [smem:[%s216]] 128
          %s218 = scalar_lea.smem [#allocation11], 4
          %219 = sst [smem:[%s218]] 128
          %s220 = scalar_lea.smem [#allocation11], 5
          %221 = sst [smem:[%s220]] 8
          %223 = dma.general %s191, 16384, %s205, %s182, [#allocation10], [#allocation11], %s203, 0
        $region28: #{tpu_custom_call.1} parent=19 // pred_fallthru
          _
      $region20: #{tpu_custom_call.1} parent=5 // pred_fallthru
        _
      %p224 = scmp.le.s32.totalorder 1, %s16
      %p225 = scmp.lt.s32.totalorder %s16, 3
      %p226 = pnand %p224, %p225
      %p227 = pneg %p226
      // Predicated region
      $region29: #{tpu_custom_call.1} parent=5 // pred_check
        _
      $region30: #{tpu_custom_call.1} parent=5 // pred_check_branch
        %229 = sbr.rel (%p226) target = $region32
      $region31: #{tpu_custom_call.1} parent=5 // pred_region
        %s230 = ssub.s32 %s16, 1
        %s231 = sand.u32 %s29, 1
        %s232 = scalar_lea.sflag [#allocation3], %s231
        %s233 = sand.u32 %s29, 1
        %s234 = smul.addr %s233, 1024
        %s235 = scalar_lea.vmem [#allocation2], %s234
        // Predicated region
        $region33: #{tpu_custom_call.1} parent=31 // pred_check
          %p236 = pneg %p42
        $region34: #{tpu_custom_call.1} parent=31 // pred_check_branch
          %238 = sbr.rel (%p236) target = $region36
        $region35: #{tpu_custom_call.1} parent=31 // pred_region
          %239 = dma.done %s232, 16384
        $region36: #{tpu_custom_call.1} parent=31 // pred_fallthru
          _
        %s240 = sand.u32 %s55, 1
        %s241 = scalar_lea.sflag [#allocation6], %s240
        %s242 = sand.u32 %s55, 1
        %s243 = smul.addr %s242, 1024
        %s244 = scalar_lea.vmem [#allocation5], %s243
        // Predicated region
        $region37: #{tpu_custom_call.1} parent=31 // pred_check
          %p245 = pneg %p68
        $region38: #{tpu_custom_call.1} parent=31 // pred_check_branch
          %247 = sbr.rel (%p245) target = $region40
        $region39: #{tpu_custom_call.1} parent=31 // pred_region
          %248 = dma.done %s241, 16384
        $region40: #{tpu_custom_call.1} parent=31 // pred_fallthru
          _
        %s249 = sand.u32 %s29, 1
        %s250 = scalar_lea.sflag [#allocation3], %s249
        %s251 = sand.u32 %s29, 1
        %s252 = smul.addr %s251, 1024
        %s253 = scalar_lea.vmem [#allocation2], %s252
        %p254 = pneg %p42
        %p255 = pneg %p39
        %s256 = sand.u32 %s55, 1
        %s257 = scalar_lea.sflag [#allocation6], %s256
        %s258 = sand.u32 %s55, 1
        %s259 = smul.addr %s258, 1024
        %s260 = scalar_lea.vmem [#allocation5], %s259
        %p261 = pneg %p68
        %p262 = pneg %p65
        %p263 = pneg %p89
        %p264 = pneg %p86
        %p265 = pneg %p110
        %p266 = pneg %p107
        %s267 = smul.u32 64, %s21
        %s268 = smul.u32 64, %s21
        %p269 = scmp.eq.s32.totalorder %s21, 0
        // Predicated region
        $region41: #{tpu_custom_call.1} parent=31 // pred_check
          %p270 = pneg %p269
        $region42: #{tpu_custom_call.1} parent=31 // pred_check_branch
          %272 = sbr.rel (%p270) target = $region44
        $region43: #{tpu_custom_call.1} parent=31 // pred_region
          %vm273 = vcmask 9216
          %274 = vst.msk [vmem:[#allocation7] sm:$0x3] %vm273, 0.0
        $region44: #{tpu_custom_call.1} parent=31 // pred_fallthru
          _
        %v275 = vld [vmem:[%s235] sm:$0xff]
        %v276 = vld [vmem:[%s235 + $0x8] sm:$0xff]
        %v277 = vld [vmem:[%s235 + $0x10] sm:$0xff]
        %v278 = vld [vmem:[%s235 + $0x18] sm:$0xff]
        %v279 = vld [vmem:[%s235 + $0x20] sm:$0xff]
        %v280 = vld [vmem:[%s235 + $0x28] sm:$0xff]
        %v281 = vld [vmem:[%s235 + $0x30] sm:$0xff]
        %v282 = vld [vmem:[%s235 + $0x38] sm:$0xff]
        %v283 = vld [vmem:[%s235 + $0x40] sm:$0xff]
        %v284 = vld [vmem:[%s235 + $0x48] sm:$0xff]
        %v285 = vld [vmem:[%s235 + $0x50] sm:$0xff]
        %v286 = vld [vmem:[%s235 + $0x58] sm:$0xff]
        %v287 = vld [vmem:[%s235 + $0x60] sm:$0xff]
        %v288 = vld [vmem:[%s235 + $0x68] sm:$0xff]
        %v289 = vld [vmem:[%s235 + $0x70] sm:$0xff]
        %v290 = vld [vmem:[%s235 + $0x78] sm:$0xff]
        %v291 = vld [vmem:[%s235 + $0x80] sm:$0xff]
        %v292 = vld [vmem:[%s235 + $0x88] sm:$0xff]
        %v293 = vld [vmem:[%s235 + $0x90] sm:$0xff]
        %v294 = vld [vmem:[%s235 + $0x98] sm:$0xff]
        %v295 = vld [vmem:[%s235 + $0xa0] sm:$0xff]
        %v296 = vld [vmem:[%s235 + $0xa8] sm:$0xff]
        %v297 = vld [vmem:[%s235 + $0xb0] sm:$0xff]
        %v298 = vld [vmem:[%s235 + $0xb8] sm:$0xff]
        %v299 = vld [vmem:[%s235 + $0xc0] sm:$0xff]
        %v300 = vld [vmem:[%s235 + $0xc8] sm:$0xff]
        %v301 = vld [vmem:[%s235 + $0xd0] sm:$0xff]
        %v302 = vld [vmem:[%s235 + $0xd8] sm:$0xff]
        %v303 = vld [vmem:[%s235 + $0xe0] sm:$0xff]
        %v304 = vld [vmem:[%s235 + $0xe8] sm:$0xff]
        %v305 = vld [vmem:[%s235 + $0xf0] sm:$0xff]
        %v306 = vld [vmem:[%s235 + $0xf8] sm:$0xff]
        %v307 = vld [vmem:[%s235 + $0x100] sm:$0xff]
        %v308 = vld [vmem:[%s235 + $0x108] sm:$0xff]
        %v309 = vld [vmem:[%s235 + $0x110] sm:$0xff]
        %v310 = vld [vmem:[%s235 + $0x118] sm:$0xff]
        %v311 = vld [vmem:[%s235 + $0x120] sm:$0xff]
        %v312 = vld [vmem:[%s235 + $0x128] sm:$0xff]
        %v313 = vld [vmem:[%s235 + $0x130] sm:$0xff]
        %v314 = vld [vmem:[%s235 + $0x138] sm:$0xff]
        %v315 = vld [vmem:[%s235 + $0x140] sm:$0xff]
        %v316 = vld [vmem:[%s235 + $0x148] sm:$0xff]
        %v317 = vld [vmem:[%s235 + $0x150] sm:$0xff]
        %v318 = vld [vmem:[%s235 + $0x158] sm:$0xff]
        %v319 = vld [vmem:[%s235 + $0x160] sm:$0xff]
        %v320 = vld [vmem:[%s235 + $0x168] sm:$0xff]
        %v321 = vld [vmem:[%s235 + $0x170] sm:$0xff]
        %v322 = vld [vmem:[%s235 + $0x178] sm:$0xff]
        %v323 = vld [vmem:[%s235 + $0x180] sm:$0xff]
        %v324 = vld [vmem:[%s235 + $0x188] sm:$0xff]
        %v325 = vld [vmem:[%s235 + $0x190] sm:$0xff]
        %v326 = vld [vmem:[%s235 + $0x198] sm:$0xff]
        %v327 = vld [vmem:[%s235 + $0x1a0] sm:$0xff]
        %v328 = vld [vmem:[%s235 + $0x1a8] sm:$0xff]
        %v329 = vld [vmem:[%s235 + $0x1b0] sm:$0xff]
        %v330 = vld [vmem:[%s235 + $0x1b8] sm:$0xff]
        %v331 = vld [vmem:[%s235 + $0x1c0] sm:$0xff]
        %v332 = vld [vmem:[%s235 + $0x1c8] sm:$0xff]
        %v333 = vld [vmem:[%s235 + $0x1d0] sm:$0xff]
        %v334 = vld [vmem:[%s235 + $0x1d8] sm:$0xff]
        %v335 = vld [vmem:[%s235 + $0x1e0] sm:$0xff]
        %v336 = vld [vmem:[%s235 + $0x1e8] sm:$0xff]
        %v337 = vld [vmem:[%s235 + $0x1f0] sm:$0xff]
        %v338 = vld [vmem:[%s235 + $0x1f8] sm:$0xff]
        %v339 = vld [vmem:[%s235 + $0x200] sm:$0xff]
        %v340 = vld [vmem:[%s235 + $0x208] sm:$0xff]
        %v341 = vld [vmem:[%s235 + $0x210] sm:$0xff]
        %v342 = vld [vmem:[%s235 + $0x218] sm:$0xff]
        %v343 = vld [vmem:[%s235 + $0x220] sm:$0xff]
        %v344 = vld [vmem:[%s235 + $0x228] sm:$0xff]
        %v345 = vld [vmem:[%s235 + $0x230] sm:$0xff]
        %v346 = vld [vmem:[%s235 + $0x238] sm:$0xff]
        %v347 = vld [vmem:[%s235 + $0x240] sm:$0xff]
        %v348 = vld [vmem:[%s235 + $0x248] sm:$0xff]
        %v349 = vld [vmem:[%s235 + $0x250] sm:$0xff]
        %v350 = vld [vmem:[%s235 + $0x258] sm:$0xff]
        %v351 = vld [vmem:[%s235 + $0x260] sm:$0xff]
        %v352 = vld [vmem:[%s235 + $0x268] sm:$0xff]
        %v353 = vld [vmem:[%s235 + $0x270] sm:$0xff]
        %v354 = vld [vmem:[%s235 + $0x278] sm:$0xff]
        %v355 = vld [vmem:[%s235 + $0x280] sm:$0xff]
        %v356 = vld [vmem:[%s235 + $0x288] sm:$0xff]
        %v357 = vld [vmem:[%s235 + $0x290] sm:$0xff]
        %v358 = vld [vmem:[%s235 + $0x298] sm:$0xff]
        %v359 = vld [vmem:[%s235 + $0x2a0] sm:$0xff]
        %v360 = vld [vmem:[%s235 + $0x2a8] sm:$0xff]
        %v361 = vld [vmem:[%s235 + $0x2b0] sm:$0xff]
        %v362 = vld [vmem:[%s235 + $0x2b8] sm:$0xff]
        %v363 = vld [vmem:[%s235 + $0x2c0] sm:$0xff]
        %v364 = vld [vmem:[%s235 + $0x2c8] sm:$0xff]
        %v365 = vld [vmem:[%s235 + $0x2d0] sm:$0xff]
        %v366 = vld [vmem:[%s235 + $0x2d8] sm:$0xff]
        %v367 = vld [vmem:[%s235 + $0x2e0] sm:$0xff]
        %v368 = vld [vmem:[%s235 + $0x2e8] sm:$0xff]
        %v369 = vld [vmem:[%s235 + $0x2f0] sm:$0xff]
        %v370 = vld [vmem:[%s235 + $0x2f8] sm:$0xff]
        %v371 = vld [vmem:[%s235 + $0x300] sm:$0xff]
        %v372 = vld [vmem:[%s235 + $0x308] sm:$0xff]
        %v373 = vld [vmem:[%s235 + $0x310] sm:$0xff]
        %v374 = vld [vmem:[%s235 + $0x318] sm:$0xff]
        %v375 = vld [vmem:[%s235 + $0x320] sm:$0xff]
        %v376 = vld [vmem:[%s235 + $0x328] sm:$0xff]
        %v377 = vld [vmem:[%s235 + $0x330] sm:$0xff]
        %v378 = vld [vmem:[%s235 + $0x338] sm:$0xff]
        %v379 = vld [vmem:[%s235 + $0x340] sm:$0xff]
        %v380 = vld [vmem:[%s235 + $0x348] sm:$0xff]
        %v381 = vld [vmem:[%s235 + $0x350] sm:$0xff]
        %v382 = vld [vmem:[%s235 + $0x358] sm:$0xff]
        %v383 = vld [vmem:[%s235 + $0x360] sm:$0xff]
        %v384 = vld [vmem:[%s235 + $0x368] sm:$0xff]
        %v385 = vld [vmem:[%s235 + $0x370] sm:$0xff]
        %v386 = vld [vmem:[%s235 + $0x378] sm:$0xff]
        %v387 = vld [vmem:[%s235 + $0x380] sm:$0xff]
        %v388 = vld [vmem:[%s235 + $0x388] sm:$0xff]
        %v389 = vld [vmem:[%s235 + $0x390] sm:$0xff]
        %v390 = vld [vmem:[%s235 + $0x398] sm:$0xff]
        %v391 = vld [vmem:[%s235 + $0x3a0] sm:$0xff]
        %v392 = vld [vmem:[%s235 + $0x3a8] sm:$0xff]
        %v393 = vld [vmem:[%s235 + $0x3b0] sm:$0xff]
        %v394 = vld [vmem:[%s235 + $0x3b8] sm:$0xff]
        %v395 = vld [vmem:[%s235 + $0x3c0] sm:$0xff]
        %v396 = vld [vmem:[%s235 + $0x3c8] sm:$0xff]
        %v397 = vld [vmem:[%s235 + $0x3d0] sm:$0xff]
        %v398 = vld [vmem:[%s235 + $0x3d8] sm:$0xff]
        %v399 = vld [vmem:[%s235 + $0x3e0] sm:$0xff]
        %v400 = vld [vmem:[%s235 + $0x3e8] sm:$0xff]
        %v401 = vld [vmem:[%s235 + $0x3f0] sm:$0xff]
        %v402 = vld [vmem:[%s235 + $0x3f8] sm:$0xff]
        %v403 = vld [vmem:[%s244] sm:$0xff]
        %v404 = vld [vmem:[%s244 + $0x8] sm:$0xff]
        %v405 = vld [vmem:[%s244 + $0x10] sm:$0xff]
        %v406 = vld [vmem:[%s244 + $0x18] sm:$0xff]
        %v407 = vld [vmem:[%s244 + $0x20] sm:$0xff]
        %v408 = vld [vmem:[%s244 + $0x28] sm:$0xff]
        %v409 = vld [vmem:[%s244 + $0x30] sm:$0xff]
        %v410 = vld [vmem:[%s244 + $0x38] sm:$0xff]
        %v411 = vld [vmem:[%s244 + $0x40] sm:$0xff]
        %v412 = vld [vmem:[%s244 + $0x48] sm:$0xff]
        %v413 = vld [vmem:[%s244 + $0x50] sm:$0xff]
        %v414 = vld [vmem:[%s244 + $0x58] sm:$0xff]
        %v415 = vld [vmem:[%s244 + $0x60] sm:$0xff]
        %v416 = vld [vmem:[%s244 + $0x68] sm:$0xff]
        %v417 = vld [vmem:[%s244 + $0x70] sm:$0xff]
        %v418 = vld [vmem:[%s244 + $0x78] sm:$0xff]
        %v419 = vld [vmem:[%s244 + $0x80] sm:$0xff]
        %v420 = vld [vmem:[%s244 + $0x88] sm:$0xff]
        %v421 = vld [vmem:[%s244 + $0x90] sm:$0xff]
        %v422 = vld [vmem:[%s244 + $0x98] sm:$0xff]
        %v423 = vld [vmem:[%s244 + $0xa0] sm:$0xff]
        %v424 = vld [vmem:[%s244 + $0xa8] sm:$0xff]
        %v425 = vld [vmem:[%s244 + $0xb0] sm:$0xff]
        %v426 = vld [vmem:[%s244 + $0xb8] sm:$0xff]
        %v427 = vld [vmem:[%s244 + $0xc0] sm:$0xff]
        %v428 = vld [vmem:[%s244 + $0xc8] sm:$0xff]
        %v429 = vld [vmem:[%s244 + $0xd0] sm:$0xff]
        %v430 = vld [vmem:[%s244 + $0xd8] sm:$0xff]
        %v431 = vld [vmem:[%s244 + $0xe0] sm:$0xff]
        %v432 = vld [vmem:[%s244 + $0xe8] sm:$0xff]
        %v433 = vld [vmem:[%s244 + $0xf0] sm:$0xff]
        %v434 = vld [vmem:[%s244 + $0xf8] sm:$0xff]
        %v435 = vld [vmem:[%s244 + $0x100] sm:$0xff]
        %v436 = vld [vmem:[%s244 + $0x108] sm:$0xff]
        %v437 = vld [vmem:[%s244 + $0x110] sm:$0xff]
        %v438 = vld [vmem:[%s244 + $0x118] sm:$0xff]
        %v439 = vld [vmem:[%s244 + $0x120] sm:$0xff]
        %v440 = vld [vmem:[%s244 + $0x128] sm:$0xff]
        %v441 = vld [vmem:[%s244 + $0x130] sm:$0xff]
        %v442 = vld [vmem:[%s244 + $0x138] sm:$0xff]
        %v443 = vld [vmem:[%s244 + $0x140] sm:$0xff]
        %v444 = vld [vmem:[%s244 + $0x148] sm:$0xff]
        %v445 = vld [vmem:[%s244 + $0x150] sm:$0xff]
        %v446 = vld [vmem:[%s244 + $0x158] sm:$0xff]
        %v447 = vld [vmem:[%s244 + $0x160] sm:$0xff]
        %v448 = vld [vmem:[%s244 + $0x168] sm:$0xff]
        %v449 = vld [vmem:[%s244 + $0x170] sm:$0xff]
        %v450 = vld [vmem:[%s244 + $0x178] sm:$0xff]
        %v451 = vld [vmem:[%s244 + $0x180] sm:$0xff]
        %v452 = vld [vmem:[%s244 + $0x188] sm:$0xff]
        %v453 = vld [vmem:[%s244 + $0x190] sm:$0xff]
        %v454 = vld [vmem:[%s244 + $0x198] sm:$0xff]
        %v455 = vld [vmem:[%s244 + $0x1a0] sm:$0xff]
        %v456 = vld [vmem:[%s244 + $0x1a8] sm:$0xff]
        %v457 = vld [vmem:[%s244 + $0x1b0] sm:$0xff]
        %v458 = vld [vmem:[%s244 + $0x1b8] sm:$0xff]
        %v459 = vld [vmem:[%s244 + $0x1c0] sm:$0xff]
        %v460 = vld [vmem:[%s244 + $0x1c8] sm:$0xff]
        %v461 = vld [vmem:[%s244 + $0x1d0] sm:$0xff]
        %v462 = vld [vmem:[%s244 + $0x1d8] sm:$0xff]
        %v463 = vld [vmem:[%s244 + $0x1e0] sm:$0xff]
        %v464 = vld [vmem:[%s244 + $0x1e8] sm:$0xff]
        %v465 = vld [vmem:[%s244 + $0x1f0] sm:$0xff]
        %v466 = vld [vmem:[%s244 + $0x1f8] sm:$0xff]
        %v467 = vmul.f32 %v275, %v403
        %v468 = vmul.f32 %v276, %v404
        %v469 = vmul.f32 %v277, %v405
        %v470 = vmul.f32 %v278, %v406
        %v471 = vmul.f32 %v279, %v407
        %v472 = vmul.f32 %v280, %v408
        %v473 = vmul.f32 %v281, %v409
        %v474 = vmul.f32 %v282, %v410
        %v475 = vmul.f32 %v283, %v411
        %v476 = vmul.f32 %v284, %v412
        %v477 = vmul.f32 %v285, %v413
        %v478 = vmul.f32 %v286, %v414
        %v479 = vmul.f32 %v287, %v415
        %v480 = vmul.f32 %v288, %v416
        %v481 = vmul.f32 %v289, %v417
        %v482 = vmul.f32 %v290, %v418
        %v483 = vmul.f32 %v291, %v419
        %v484 = vmul.f32 %v292, %v420
        %v485 = vmul.f32 %v293, %v421
        %v486 = vmul.f32 %v294, %v422
        %v487 = vmul.f32 %v295, %v423
        %v488 = vmul.f32 %v296, %v424
        %v489 = vmul.f32 %v297, %v425
        %v490 = vmul.f32 %v298, %v426
        %v491 = vmul.f32 %v299, %v427
        %v492 = vmul.f32 %v300, %v428
        %v493 = vmul.f32 %v301, %v429
        %v494 = vmul.f32 %v302, %v430
        %v495 = vmul.f32 %v303, %v431
        %v496 = vmul.f32 %v304, %v432
        %v497 = vmul.f32 %v305, %v433
        %v498 = vmul.f32 %v306, %v434
        %v499 = vmul.f32 %v307, %v435
        %v500 = vmul.f32 %v308, %v436
        %v501 = vmul.f32 %v309, %v437
        %v502 = vmul.f32 %v310, %v438
        %v503 = vmul.f32 %v311, %v439
        %v504 = vmul.f32 %v312, %v440
        %v505 = vmul.f32 %v313, %v441
        %v506 = vmul.f32 %v314, %v442
        %v507 = vmul.f32 %v315, %v443
        %v508 = vmul.f32 %v316, %v444
        %v509 = vmul.f32 %v317, %v445
        %v510 = vmul.f32 %v318, %v446
        %v511 = vmul.f32 %v319, %v447
        %v512 = vmul.f32 %v320, %v448
        %v513 = vmul.f32 %v321, %v449
        %v514 = vmul.f32 %v322, %v450
        %v515 = vmul.f32 %v323, %v451
        %v516 = vmul.f32 %v324, %v452
        %v517 = vmul.f32 %v325, %v453
        %v518 = vmul.f32 %v326, %v454
        %v519 = vmul.f32 %v327, %v455
        %v520 = vmul.f32 %v328, %v456
        %v521 = vmul.f32 %v329, %v457
        %v522 = vmul.f32 %v330, %v458
        %v523 = vmul.f32 %v331, %v459
        %v524 = vmul.f32 %v332, %v460
        %v525 = vmul.f32 %v333, %v461
        %v526 = vmul.f32 %v334, %v462
        %v527 = vmul.f32 %v335, %v463
        %v528 = vmul.f32 %v336, %v464
        %v529 = vmul.f32 %v337, %v465
        %v530 = vmul.f32 %v338, %v466
        %v531 = vmul.f32 %v339, %v403
        %v532 = vmul.f32 %v340, %v404
        %v533 = vmul.f32 %v341, %v405
        %v534 = vmul.f32 %v342, %v406
        %v535 = vmul.f32 %v343, %v407
        %v536 = vmul.f32 %v344, %v408
        %v537 = vmul.f32 %v345, %v409
        %v538 = vmul.f32 %v346, %v410
        %v539 = vmul.f32 %v347, %v411
        %v540 = vmul.f32 %v348, %v412
        %v541 = vmul.f32 %v349, %v413
        %v542 = vmul.f32 %v350, %v414
        %v543 = vmul.f32 %v351, %v415
        %v544 = vmul.f32 %v352, %v416
        %v545 = vmul.f32 %v353, %v417
        %v546 = vmul.f32 %v354, %v418
        %v547 = vmul.f32 %v355, %v419
        %v548 = vmul.f32 %v356, %v420
        %v549 = vmul.f32 %v357, %v421
        %v550 = vmul.f32 %v358, %v422
        %v551 = vmul.f32 %v359, %v423
        %v552 = vmul.f32 %v360, %v424
        %v553 = vmul.f32 %v361, %v425
        %v554 = vmul.f32 %v362, %v426
        %v555 = vmul.f32 %v363, %v427
        %v556 = vmul.f32 %v364, %v428
        %v557 = vmul.f32 %v365, %v429
        %v558 = vmul.f32 %v366, %v430
        %v559 = vmul.f32 %v367, %v431
        %v560 = vmul.f32 %v368, %v432
        %v561 = vmul.f32 %v369, %v433
        %v562 = vmul.f32 %v370, %v434
        %v563 = vmul.f32 %v371, %v435
        %v564 = vmul.f32 %v372, %v436
        %v565 = vmul.f32 %v373, %v437
        %v566 = vmul.f32 %v374, %v438
        %v567 = vmul.f32 %v375, %v439
        %v568 = vmul.f32 %v376, %v440
        %v569 = vmul.f32 %v377, %v441
        %v570 = vmul.f32 %v378, %v442
        %v571 = vmul.f32 %v379, %v443
        %v572 = vmul.f32 %v380, %v444
        %v573 = vmul.f32 %v381, %v445
        %v574 = vmul.f32 %v382, %v446
        %v575 = vmul.f32 %v383, %v447
        %v576 = vmul.f32 %v384, %v448
        %v577 = vmul.f32 %v385, %v449
        %v578 = vmul.f32 %v386, %v450
        %v579 = vmul.f32 %v387, %v451
        %v580 = vmul.f32 %v388, %v452
        %v581 = vmul.f32 %v389, %v453
        %v582 = vmul.f32 %v390, %v454
        %v583 = vmul.f32 %v391, %v455
        %v584 = vmul.f32 %v392, %v456
        %v585 = vmul.f32 %v393, %v457
        %v586 = vmul.f32 %v394, %v458
        %v587 = vmul.f32 %v395, %v459
        %v588 = vmul.f32 %v396, %v460
        %v589 = vmul.f32 %v397, %v461
        %v590 = vmul.f32 %v398, %v462
        %v591 = vmul.f32 %v399, %v463
        %v592 = vmul.f32 %v400, %v464
        %v593 = vmul.f32 %v401, %v465
        %v594 = vmul.f32 %v402, %v466
        %v595 = vadd.f32 %v467, %v468
        %v596 = vadd.f32 %v595, %v469
        %v597 = vadd.f32 %v596, %v470
        %v598 = vadd.f32 %v597, %v471
        %v599 = vadd.f32 %v598, %v472
        %v600 = vadd.f32 %v599, %v473
        %v601 = vadd.f32 %v600, %v474
        %v602 = vadd.f32 %v601, %v475
        %v603 = vadd.f32 %v602, %v476
        %v604 = vadd.f32 %v603, %v477
        %v605 = vadd.f32 %v604, %v478
        %v606 = vadd.f32 %v605, %v479
        %v607 = vadd.f32 %v606, %v480
        %v608 = vadd.f32 %v607, %v481
        %v609 = vadd.f32 %v608, %v482
        %v610 = vadd.f32 %v609, %v483
        %v611 = vadd.f32 %v610, %v484
        %v612 = vadd.f32 %v611, %v485
        %v613 = vadd.f32 %v612, %v486
        %v614 = vadd.f32 %v613, %v487
        %v615 = vadd.f32 %v614, %v488
        %v616 = vadd.f32 %v615, %v489
        %v617 = vadd.f32 %v616, %v490
        %v618 = vadd.f32 %v617, %v491
        %v619 = vadd.f32 %v618, %v492
        %v620 = vadd.f32 %v619, %v493
        %v621 = vadd.f32 %v620, %v494
        %v622 = vadd.f32 %v621, %v495
        %v623 = vadd.f32 %v622, %v496
        %v624 = vadd.f32 %v623, %v497
        %v625 = vadd.f32 %v624, %v498
        %v626 = vadd.f32 %v625, %v499
        %v627 = vadd.f32 %v626, %v500
        %v628 = vadd.f32 %v627, %v501
        %v629 = vadd.f32 %v628, %v502
        %v630 = vadd.f32 %v629, %v503
        %v631 = vadd.f32 %v630, %v504
        %v632 = vadd.f32 %v631, %v505
        %v633 = vadd.f32 %v632, %v506
        %v634 = vadd.f32 %v633, %v507
        %v635 = vadd.f32 %v634, %v508
        %v636 = vadd.f32 %v635, %v509
        %v637 = vadd.f32 %v636, %v510
        %v638 = vadd.f32 %v637, %v511
        %v639 = vadd.f32 %v638, %v512
        %v640 = vadd.f32 %v639, %v513
        %v641 = vadd.f32 %v640, %v514
        %v642 = vadd.f32 %v641, %v515
        %v643 = vadd.f32 %v642, %v516
        %v644 = vadd.f32 %v643, %v517
        %v645 = vadd.f32 %v644, %v518
        %v646 = vadd.f32 %v645, %v519
        %v647 = vadd.f32 %v646, %v520
        %v648 = vadd.f32 %v647, %v521
        %v649 = vadd.f32 %v648, %v522
        %v650 = vadd.f32 %v649, %v523
        %v651 = vadd.f32 %v650, %v524
        %v652 = vadd.f32 %v651, %v525
        %v653 = vadd.f32 %v652, %v526
        %v654 = vadd.f32 %v653, %v527
        %v655 = vadd.f32 %v654, %v528
        %v656 = vadd.f32 %v655, %v529
        %v657 = vadd.f32 %v656, %v530
        %v658 = vrot.slane %v657, 4
        %v659 = vadd.f32 %v657, %v658
        %v660 = vrot.slane %v659, 2
        %v661 = vadd.f32 %v659, %v660
        %v662 = vrot.slane %v661, 1
        %v663 = vadd.f32 %v661, %v662
        %v664 = vadd.f32 %v531, %v532
        %v665 = vadd.f32 %v664, %v533
        %v666 = vadd.f32 %v665, %v534
        %v667 = vadd.f32 %v666, %v535
        %v668 = vadd.f32 %v667, %v536
        %v669 = vadd.f32 %v668, %v537
        %v670 = vadd.f32 %v669, %v538
        %v671 = vadd.f32 %v670, %v539
        %v672 = vadd.f32 %v671, %v540
        %v673 = vadd.f32 %v672, %v541
        %v674 = vadd.f32 %v673, %v542
        %v675 = vadd.f32 %v674, %v543
        %v676 = vadd.f32 %v675, %v544
        %v677 = vadd.f32 %v676, %v545
        %v678 = vadd.f32 %v677, %v546
        %v679 = vadd.f32 %v678, %v547
        %v680 = vadd.f32 %v679, %v548
        %v681 = vadd.f32 %v680, %v549
        %v682 = vadd.f32 %v681, %v550
        %v683 = vadd.f32 %v682, %v551
        %v684 = vadd.f32 %v683, %v552
        %v685 = vadd.f32 %v684, %v553
        %v686 = vadd.f32 %v685, %v554
        %v687 = vadd.f32 %v686, %v555
        %v688 = vadd.f32 %v687, %v556
        %v689 = vadd.f32 %v688, %v557
        %v690 = vadd.f32 %v689, %v558
        %v691 = vadd.f32 %v690, %v559
        %v692 = vadd.f32 %v691, %v560
        %v693 = vadd.f32 %v692, %v561
        %v694 = vadd.f32 %v693, %v562
        %v695 = vadd.f32 %v694, %v563
        %v696 = vadd.f32 %v695, %v564
        %v697 = vadd.f32 %v696, %v565
        %v698 = vadd.f32 %v697, %v566
        %v699 = vadd.f32 %v698, %v567
        %v700 = vadd.f32 %v699, %v568
        %v701 = vadd.f32 %v700, %v569
        %v702 = vadd.f32 %v701, %v570
        %v703 = vadd.f32 %v702, %v571
        %v704 = vadd.f32 %v703, %v572
        %v705 = vadd.f32 %v704, %v573
        %v706 = vadd.f32 %v705, %v574
        %v707 = vadd.f32 %v706, %v575
        %v708 = vadd.f32 %v707, %v576
        %v709 = vadd.f32 %v708, %v577
        %v710 = vadd.f32 %v709, %v578
        %v711 = vadd.f32 %v710, %v579
        %v712 = vadd.f32 %v711, %v580
        %v713 = vadd.f32 %v712, %v581
        %v714 = vadd.f32 %v713, %v582
        %v715 = vadd.f32 %v714, %v583
        %v716 = vadd.f32 %v715, %v584
        %v717 = vadd.f32 %v716, %v585
        %v718 = vadd.f32 %v717, %v586
        %v719 = vadd.f32 %v718, %v587
        %v720 = vadd.f32 %v719, %v588
        %v721 = vadd.f32 %v720, %v589
        %v722 = vadd.f32 %v721, %v590
        %v723 = vadd.f32 %v722, %v591
        %v724 = vadd.f32 %v723, %v592
        %v725 = vadd.f32 %v724, %v593
        %v726 = vadd.f32 %v725, %v594
        %v727 = vrot.slane %v726, 4
        %v728 = vadd.f32 %v726, %v727
        %v729 = vrot.slane %v728, 2
        %v730 = vadd.f32 %v728, %v729
        %v731 = vrot.slane %v730, 1
        %v732 = vadd.f32 %v730, %v731
        %vm735 = vcmask 1041409
        %v736 = vsel %vm735, %v732, %v663
        %vm738 = vcmask 1041408
        %v739 = vsel %vm738, %v736, 0.0
        %740 = vadd.xlane.f32.xlu0 %v739
        %v741 = vpop.xlane.xlu0 %740
        %s742 = scalar_lea.vmem %s244, 512 [#allocation5]
        %v743 = vld [vmem:[%s742] sm:$0xff]
        %v744 = vld [vmem:[%s742 + $0x8] sm:$0xff]
        %v745 = vld [vmem:[%s742 + $0x10] sm:$0xff]
        %v746 = vld [vmem:[%s742 + $0x18] sm:$0xff]
        %v747 = vld [vmem:[%s742 + $0x20] sm:$0xff]
        %v748 = vld [vmem:[%s742 + $0x28] sm:$0xff]
        %v749 = vld [vmem:[%s742 + $0x30] sm:$0xff]
        %v750 = vld [vmem:[%s742 + $0x38] sm:$0xff]
        %v751 = vld [vmem:[%s742 + $0x40] sm:$0xff]
        %v752 = vld [vmem:[%s742 + $0x48] sm:$0xff]
        %v753 = vld [vmem:[%s742 + $0x50] sm:$0xff]
        %v754 = vld [vmem:[%s742 + $0x58] sm:$0xff]
        %v755 = vld [vmem:[%s742 + $0x60] sm:$0xff]
        %v756 = vld [vmem:[%s742 + $0x68] sm:$0xff]
        %v757 = vld [vmem:[%s742 + $0x70] sm:$0xff]
        %v758 = vld [vmem:[%s742 + $0x78] sm:$0xff]
        %v759 = vld [vmem:[%s742 + $0x80] sm:$0xff]
        %v760 = vld [vmem:[%s742 + $0x88] sm:$0xff]
        %v761 = vld [vmem:[%s742 + $0x90] sm:$0xff]
        %v762 = vld [vmem:[%s742 + $0x98] sm:$0xff]
        %v763 = vld [vmem:[%s742 + $0xa0] sm:$0xff]
        %v764 = vld [vmem:[%s742 + $0xa8] sm:$0xff]
        %v765 = vld [vmem:[%s742 + $0xb0] sm:$0xff]
        %v766 = vld [vmem:[%s742 + $0xb8] sm:$0xff]
        %v767 = vld [vmem:[%s742 + $0xc0] sm:$0xff]
        %v768 = vld [vmem:[%s742 + $0xc8] sm:$0xff]
        %v769 = vld [vmem:[%s742 + $0xd0] sm:$0xff]
        %v770 = vld [vmem:[%s742 + $0xd8] sm:$0xff]
        %v771 = vld [vmem:[%s742 + $0xe0] sm:$0xff]
        %v772 = vld [vmem:[%s742 + $0xe8] sm:$0xff]
        %v773 = vld [vmem:[%s742 + $0xf0] sm:$0xff]
        %v774 = vld [vmem:[%s742 + $0xf8] sm:$0xff]
        %v775 = vld [vmem:[%s742 + $0x100] sm:$0xff]
        %v776 = vld [vmem:[%s742 + $0x108] sm:$0xff]
        %v777 = vld [vmem:[%s742 + $0x110] sm:$0xff]
        %v778 = vld [vmem:[%s742 + $0x118] sm:$0xff]
        %v779 = vld [vmem:[%s742 + $0x120] sm:$0xff]
        %v780 = vld [vmem:[%s742 + $0x128] sm:$0xff]
        %v781 = vld [vmem:[%s742 + $0x130] sm:$0xff]
        %v782 = vld [vmem:[%s742 + $0x138] sm:$0xff]
        %v783 = vld [vmem:[%s742 + $0x140] sm:$0xff]
        %v784 = vld [vmem:[%s742 + $0x148] sm:$0xff]
        %v785 = vld [vmem:[%s742 + $0x150] sm:$0xff]
        %v786 = vld [vmem:[%s742 + $0x158] sm:$0xff]
        %v787 = vld [vmem:[%s742 + $0x160] sm:$0xff]
        %v788 = vld [vmem:[%s742 + $0x168] sm:$0xff]
        %v789 = vld [vmem:[%s742 + $0x170] sm:$0xff]
        %v790 = vld [vmem:[%s742 + $0x178] sm:$0xff]
        %v791 = vld [vmem:[%s742 + $0x180] sm:$0xff]
        %v792 = vld [vmem:[%s742 + $0x188] sm:$0xff]
        %v793 = vld [vmem:[%s742 + $0x190] sm:$0xff]
        %v794 = vld [vmem:[%s742 + $0x198] sm:$0xff]
        %v795 = vld [vmem:[%s742 + $0x1a0] sm:$0xff]
        %v796 = vld [vmem:[%s742 + $0x1a8] sm:$0xff]
        %v797 = vld [vmem:[%s742 + $0x1b0] sm:$0xff]
        %v798 = vld [vmem:[%s742 + $0x1b8] sm:$0xff]
        %v799 = vld [vmem:[%s742 + $0x1c0] sm:$0xff]
        %v800 = vld [vmem:[%s742 + $0x1c8] sm:$0xff]
        %v801 = vld [vmem:[%s742 + $0x1d0] sm:$0xff]
        %v802 = vld [vmem:[%s742 + $0x1d8] sm:$0xff]
        %v803 = vld [vmem:[%s742 + $0x1e0] sm:$0xff]
        %v804 = vld [vmem:[%s742 + $0x1e8] sm:$0xff]
        %v805 = vld [vmem:[%s742 + $0x1f0] sm:$0xff]
        %v806 = vld [vmem:[%s742 + $0x1f8] sm:$0xff]
        %v807 = vmul.f32 %v275, %v743
        %v808 = vmul.f32 %v276, %v744
        %v809 = vmul.f32 %v277, %v745
        %v810 = vmul.f32 %v278, %v746
        %v811 = vmul.f32 %v279, %v747
        %v812 = vmul.f32 %v280, %v748
        %v813 = vmul.f32 %v281, %v749
        %v814 = vmul.f32 %v282, %v750
        %v815 = vmul.f32 %v283, %v751
        %v816 = vmul.f32 %v284, %v752
        %v817 = vmul.f32 %v285, %v753
        %v818 = vmul.f32 %v286, %v754
        %v819 = vmul.f32 %v287, %v755
        %v820 = vmul.f32 %v288, %v756
        %v821 = vmul.f32 %v289, %v757
        %v822 = vmul.f32 %v290, %v758
        %v823 = vmul.f32 %v291, %v759
        %v824 = vmul.f32 %v292, %v760
        %v825 = vmul.f32 %v293, %v761
        %v826 = vmul.f32 %v294, %v762
        %v827 = vmul.f32 %v295, %v763
        %v828 = vmul.f32 %v296, %v764
        %v829 = vmul.f32 %v297, %v765
        %v830 = vmul.f32 %v298, %v766
        %v831 = vmul.f32 %v299, %v767
        %v832 = vmul.f32 %v300, %v768
        %v833 = vmul.f32 %v301, %v769
        %v834 = vmul.f32 %v302, %v770
        %v835 = vmul.f32 %v303, %v771
        %v836 = vmul.f32 %v304, %v772
        %v837 = vmul.f32 %v305, %v773
        %v838 = vmul.f32 %v306, %v774
        %v839 = vmul.f32 %v307, %v775
        %v840 = vmul.f32 %v308, %v776
        %v841 = vmul.f32 %v309, %v777
        %v842 = vmul.f32 %v310, %v778
        %v843 = vmul.f32 %v311, %v779
        %v844 = vmul.f32 %v312, %v780
        %v845 = vmul.f32 %v313, %v781
        %v846 = vmul.f32 %v314, %v782
        %v847 = vmul.f32 %v315, %v783
        %v848 = vmul.f32 %v316, %v784
        %v849 = vmul.f32 %v317, %v785
        %v850 = vmul.f32 %v318, %v786
        %v851 = vmul.f32 %v319, %v787
        %v852 = vmul.f32 %v320, %v788
        %v853 = vmul.f32 %v321, %v789
        %v854 = vmul.f32 %v322, %v790
        %v855 = vmul.f32 %v323, %v791
        %v856 = vmul.f32 %v324, %v792
        %v857 = vmul.f32 %v325, %v793
        %v858 = vmul.f32 %v326, %v794
        %v859 = vmul.f32 %v327, %v795
        %v860 = vmul.f32 %v328, %v796
        %v861 = vmul.f32 %v329, %v797
        %v862 = vmul.f32 %v330, %v798
        %v863 = vmul.f32 %v331, %v799
        %v864 = vmul.f32 %v332, %v800
        %v865 = vmul.f32 %v333, %v801
        %v866 = vmul.f32 %v334, %v802
        %v867 = vmul.f32 %v335, %v803
        %v868 = vmul.f32 %v336, %v804
        %v869 = vmul.f32 %v337, %v805
        %v870 = vmul.f32 %v338, %v806
        %v871 = vmul.f32 %v339, %v743
        %v872 = vmul.f32 %v340, %v744
        %v873 = vmul.f32 %v341, %v745
        %v874 = vmul.f32 %v342, %v746
        %v875 = vmul.f32 %v343, %v747
        %v876 = vmul.f32 %v344, %v748
        %v877 = vmul.f32 %v345, %v749
        %v878 = vmul.f32 %v346, %v750
        %v879 = vmul.f32 %v347, %v751
        %v880 = vmul.f32 %v348, %v752
        %v881 = vmul.f32 %v349, %v753
        %v882 = vmul.f32 %v350, %v754
        %v883 = vmul.f32 %v351, %v755
        %v884 = vmul.f32 %v352, %v756
        %v885 = vmul.f32 %v353, %v757
        %v886 = vmul.f32 %v354, %v758
        %v887 = vmul.f32 %v355, %v759
        %v888 = vmul.f32 %v356, %v760
        %v889 = vmul.f32 %v357, %v761
        %v890 = vmul.f32 %v358, %v762
        %v891 = vmul.f32 %v359, %v763
        %v892 = vmul.f32 %v360, %v764
        %v893 = vmul.f32 %v361, %v765
        %v894 = vmul.f32 %v362, %v766
        %v895 = vmul.f32 %v363, %v767
        %v896 = vmul.f32 %v364, %v768
        %v897 = vmul.f32 %v365, %v769
        %v898 = vmul.f32 %v366, %v770
        %v899 = vmul.f32 %v367, %v771
        %v900 = vmul.f32 %v368, %v772
        %v901 = vmul.f32 %v369, %v773
        %v902 = vmul.f32 %v370, %v774
        %v903 = vmul.f32 %v371, %v775
        %v904 = vmul.f32 %v372, %v776
        %v905 = vmul.f32 %v373, %v777
        %v906 = vmul.f32 %v374, %v778
        %v907 = vmul.f32 %v375, %v779
        %v908 = vmul.f32 %v376, %v780
        %v909 = vmul.f32 %v377, %v781
        %v910 = vmul.f32 %v378, %v782
        %v911 = vmul.f32 %v379, %v783
        %v912 = vmul.f32 %v380, %v784
        %v913 = vmul.f32 %v381, %v785
        %v914 = vmul.f32 %v382, %v786
        %v915 = vmul.f32 %v383, %v787
        %v916 = vmul.f32 %v384, %v788
        %v917 = vmul.f32 %v385, %v789
        %v918 = vmul.f32 %v386, %v790
        %v919 = vmul.f32 %v387, %v791
        %v920 = vmul.f32 %v388, %v792
        %v921 = vmul.f32 %v389, %v793
        %v922 = vmul.f32 %v390, %v794
        %v923 = vmul.f32 %v391, %v795
        %v924 = vmul.f32 %v392, %v796
        %v925 = vmul.f32 %v393, %v797
        %v926 = vmul.f32 %v394, %v798
        %v927 = vmul.f32 %v395, %v799
        %v928 = vmul.f32 %v396, %v800
        %v929 = vmul.f32 %v397, %v801
        %v930 = vmul.f32 %v398, %v802
        %v931 = vmul.f32 %v399, %v803
        %v932 = vmul.f32 %v400, %v804
        %v933 = vmul.f32 %v401, %v805
        %v934 = vmul.f32 %v402, %v806
        %v935 = vadd.f32 %v807, %v808
        %v936 = vadd.f32 %v935, %v809
        %v937 = vadd.f32 %v936, %v810
        %v938 = vadd.f32 %v937, %v811
        %v939 = vadd.f32 %v938, %v812
        %v940 = vadd.f32 %v939, %v813
        %v941 = vadd.f32 %v940, %v814
        %v942 = vadd.f32 %v941, %v815
        %v943 = vadd.f32 %v942, %v816
        %v944 = vadd.f32 %v943, %v817
        %v945 = vadd.f32 %v944, %v818
        %v946 = vadd.f32 %v945, %v819
        %v947 = vadd.f32 %v946, %v820
        %v948 = vadd.f32 %v947, %v821
        %v949 = vadd.f32 %v948, %v822
        %v950 = vadd.f32 %v949, %v823
        %v951 = vadd.f32 %v950, %v824
        %v952 = vadd.f32 %v951, %v825
        %v953 = vadd.f32 %v952, %v826
        %v954 = vadd.f32 %v953, %v827
        %v955 = vadd.f32 %v954, %v828
        %v956 = vadd.f32 %v955, %v829
        %v957 = vadd.f32 %v956, %v830
        %v958 = vadd.f32 %v957, %v831
        %v959 = vadd.f32 %v958, %v832
        %v960 = vadd.f32 %v959, %v833
        %v961 = vadd.f32 %v960, %v834
        %v962 = vadd.f32 %v961, %v835
        %v963 = vadd.f32 %v962, %v836
        %v964 = vadd.f32 %v963, %v837
        %v965 = vadd.f32 %v964, %v838
        %v966 = vadd.f32 %v965, %v839
        %v967 = vadd.f32 %v966, %v840
        %v968 = vadd.f32 %v967, %v841
        %v969 = vadd.f32 %v968, %v842
        %v970 = vadd.f32 %v969, %v843
        %v971 = vadd.f32 %v970, %v844
        %v972 = vadd.f32 %v971, %v845
        %v973 = vadd.f32 %v972, %v846
        %v974 = vadd.f32 %v973, %v847
        %v975 = vadd.f32 %v974, %v848
        %v976 = vadd.f32 %v975, %v849
        %v977 = vadd.f32 %v976, %v850
        %v978 = vadd.f32 %v977, %v851
        %v979 = vadd.f32 %v978, %v852
        %v980 = vadd.f32 %v979, %v853
        %v981 = vadd.f32 %v980, %v854
        %v982 = vadd.f32 %v981, %v855
        %v983 = vadd.f32 %v982, %v856
        %v984 = vadd.f32 %v983, %v857
        %v985 = vadd.f32 %v984, %v858
        %v986 = vadd.f32 %v985, %v859
        %v987 = vadd.f32 %v986, %v860
        %v988 = vadd.f32 %v987, %v861
        %v989 = vadd.f32 %v988, %v862
        %v990 = vadd.f32 %v989, %v863
        %v991 = vadd.f32 %v990, %v864
        %v992 = vadd.f32 %v991, %v865
        %v993 = vadd.f32 %v992, %v866
        %v994 = vadd.f32 %v993, %v867
        %v995 = vadd.f32 %v994, %v868
        %v996 = vadd.f32 %v995, %v869
        %v997 = vadd.f32 %v996, %v870
        %v998 = vrot.slane %v997, 4
        %v999 = vadd.f32 %v997, %v998
        %v1000 = vrot.slane %v999, 2
        %v1001 = vadd.f32 %v999, %v1000
        %v1002 = vrot.slane %v1001, 1
        %v1003 = vadd.f32 %v1001, %v1002
        %v1004 = vadd.f32 %v871, %v872
        %v1005 = vadd.f32 %v1004, %v873
        %v1006 = vadd.f32 %v1005, %v874
        %v1007 = vadd.f32 %v1006, %v875
        %v1008 = vadd.f32 %v1007, %v876
        %v1009 = vadd.f32 %v1008, %v877
        %v1010 = vadd.f32 %v1009, %v878
        %v1011 = vadd.f32 %v1010, %v879
        %v1012 = vadd.f32 %v1011, %v880
        %v1013 = vadd.f32 %v1012, %v881
        %v1014 = vadd.f32 %v1013, %v882
        %v1015 = vadd.f32 %v1014, %v883
        %v1016 = vadd.f32 %v1015, %v884
        %v1017 = vadd.f32 %v1016, %v885
        %v1018 = vadd.f32 %v1017, %v886
        %v1019 = vadd.f32 %v1018, %v887
        %v1020 = vadd.f32 %v1019, %v888
        %v1021 = vadd.f32 %v1020, %v889
        %v1022 = vadd.f32 %v1021, %v890
        %v1023 = vadd.f32 %v1022, %v891
        %v1024 = vadd.f32 %v1023, %v892
        %v1025 = vadd.f32 %v1024, %v893
        %v1026 = vadd.f32 %v1025, %v894
        %v1027 = vadd.f32 %v1026, %v895
        %v1028 = vadd.f32 %v1027, %v896
        %v1029 = vadd.f32 %v1028, %v897
        %v1030 = vadd.f32 %v1029, %v898
        %v1031 = vadd.f32 %v1030, %v899
        %v1032 = vadd.f32 %v1031, %v900
        %v1033 = vadd.f32 %v1032, %v901
        %v1034 = vadd.f32 %v1033, %v902
        %v1035 = vadd.f32 %v1034, %v903
        %v1036 = vadd.f32 %v1035, %v904
        %v1037 = vadd.f32 %v1036, %v905
        %v1038 = vadd.f32 %v1037, %v906
        %v1039 = vadd.f32 %v1038, %v907
        %v1040 = vadd.f32 %v1039, %v908
        %v1041 = vadd.f32 %v1040, %v909
        %v1042 = vadd.f32 %v1041, %v910
        %v1043 = vadd.f32 %v1042, %v911
        %v1044 = vadd.f32 %v1043, %v912
        %v1045 = vadd.f32 %v1044, %v913
        %v1046 = vadd.f32 %v1045, %v914
        %v1047 = vadd.f32 %v1046, %v915
        %v1048 = vadd.f32 %v1047, %v916
        %v1049 = vadd.f32 %v1048, %v917
        %v1050 = vadd.f32 %v1049, %v918
        %v1051 = vadd.f32 %v1050, %v919
        %v1052 = vadd.f32 %v1051, %v920
        %v1053 = vadd.f32 %v1052, %v921
        %v1054 = vadd.f32 %v1053, %v922
        %v1055 = vadd.f32 %v1054, %v923
        %v1056 = vadd.f32 %v1055, %v924
        %v1057 = vadd.f32 %v1056, %v925
        %v1058 = vadd.f32 %v1057, %v926
        %v1059 = vadd.f32 %v1058, %v927
        %v1060 = vadd.f32 %v1059, %v928
        %v1061 = vadd.f32 %v1060, %v929
        %v1062 = vadd.f32 %v1061, %v930
        %v1063 = vadd.f32 %v1062, %v931
        %v1064 = vadd.f32 %v1063, %v932
        %v1065 = vadd.f32 %v1064, %v933
        %v1066 = vadd.f32 %v1065, %v934
        %v1067 = vrot.slane %v1066, 4
        %v1068 = vadd.f32 %v1066, %v1067
        %v1069 = vrot.slane %v1068, 2
        %v1070 = vadd.f32 %v1068, %v1069
        %v1071 = vrot.slane %v1070, 1
        %v1072 = vadd.f32 %v1070, %v1071
        %v1075 = vsel %vm735, %v1072, %v1003
        %v1077 = vsel %vm738, %v1075, 0.0
        %1078 = vadd.xlane.f32.xlu0 %v1077
        %v1079 = vpop.xlane.xlu0 %1078
        %v1080 = vld [vmem:[#allocation7] sm:$0x3]
        %vm1081 = vcmask 7168
        %v1082 = vsel %vm1081, %v741, %v1079
        %v1083 = vadd.f32 %v1080, %v1082
        %vm1084 = vcmask 9216
        %1085 = vst.msk [vmem:[#allocation7] sm:$0x3] %vm1084, %v1083
        %p1086 = scmp.eq.s32.totalorder %s21, 1
        // Predicated region
        $region45: #{tpu_custom_call.1} parent=31 // pred_check
          %p1087 = pneg %p1086
        $region46: #{tpu_custom_call.1} parent=31 // pred_check_branch
          %1089 = sbr.rel (%p1087) target = $region48
        $region47: #{tpu_custom_call.1} parent=31 // pred_region
          %v1090 = vld [vmem:[#allocation7] sm:$0x3]
          %v1091 = vld [vmem:[%s2] sm:$0x1]
          %v1093 = vlaneseq
          %v1094 = vshrl.u32 %v1093, 7
          %v1095 = vsub.s32 0, %v1094
          %v1096 = vrot.slane %v1091, %v1095
          %v1098 = vadd.f32 %v1090, %v1096
          %1099 = vst.msk [vmem:[#allocation7] sm:$0x3] %vm1084, %v1098
        $region48: #{tpu_custom_call.1} parent=31 // pred_fallthru
          _
        // Predicated region
        $region49: #{tpu_custom_call.1} parent=31 // pred_check
          %p1100 = pneg %p107
        $region50: #{tpu_custom_call.1} parent=31 // pred_check_branch
          %1102 = sbr.rel (%p1100) target = $region52
        $region51: #{tpu_custom_call.1} parent=31 // pred_region
          %s1104 = ssub.s32 32, 32
          %1105 = vsyncadd [#allocation4], %s1104
          %s1107 = sshll.u32 [#allocation7], 4
          %s1108 = int_to_ptr.vmem [resolvable:$true] %s1107
          %1110 = dma.vmem_to_hbm [thread:$0]  %s1108, 32, %s3, [#allocation4]
        $region52: #{tpu_custom_call.1} parent=31 // pred_fallthru
          _
        // Predicated region
        $region53: #{tpu_custom_call.1} parent=31 // pred_check
          %p1111 = pneg %p107
        $region54: #{tpu_custom_call.1} parent=31 // pred_check_branch
          %1113 = sbr.rel (%p1111) target = $region56
        $region55: #{tpu_custom_call.1} parent=31 // pred_region
          %1114 = dma.done [#allocation4], 32
        $region56: #{tpu_custom_call.1} parent=31 // pred_fallthru
          _
      $region32: #{tpu_custom_call.1} parent=5 // pred_fallthru
        _
      %p1115 = scmp.le.s32.totalorder 2, %s16
      // Predicated region
      $region57: #{tpu_custom_call.1} parent=5 // pred_check
        %p1116 = pneg %p1115
      $region58: #{tpu_custom_call.1} parent=5 // pred_check_branch
        %1118 = sbr.rel (%p1116) target = $region60
      $region59: #{tpu_custom_call.1} parent=5 // pred_region
        %s1119 = ssub.s32 %s16, 2
      $region60: #{tpu_custom_call.1} parent=5 // pred_fallthru
        _
    $region6: #{tpu_custom_call.1} parent=1 // loop_footer
      %s20 = sadd.s32 1, %s16
    $region7: #{tpu_custom_call.1} parent=1 // loop_footer_branch
      %15 = sbr.rel target = $region3
    $region8: #{tpu_custom_call.1} parent=1 // loop_exit
      _
    %1120 = vsyncpa [#allocation3], 1
    %s1121 = scalar_lea.sflag [#allocation3], 1
    %1122 = vsyncpa %s1121, 1
    %1123 = vsyncpa [#allocation6], 1
    %s1124 = scalar_lea.sflag [#allocation6], 1
    %1125 = vsyncpa %s1124, 1
    %1126 = vsyncpa [#allocation4], 1
    %s1127 = scalar_lea.sflag [#allocation4], 1
    %1128 = vsyncpa %s1127, 1

</llo_original>
